<compile_context>
chip_gen: v7x
topology: tpu7x:2x2x1
jax: 0.10.0
libtpu: 0.0.40
codegen_flags: <defaults>
</compile_context>

<pallas_src>
import jax
import jax.numpy as jnp
from jax.experimental import pallas as pl
from jax.experimental.pallas import tpu as pltpu


def _round_up(x, m):
    return (x + m - 1) // m * m


def _vmem_capacity_bytes():
    # v5e/v6e: 128 MiB per TensorCore; v7x: 64 MiB.  Conservative fallback.
    try:
        return int(pltpu.get_tpu_info().vmem_capacity_bytes)
    except Exception:
        return 64 << 20


def _epilogue(h1_acc_f32, b1_ref, w2_ref, b2_ref, w3_ref, b3_ref, o_ref):
    """Layers 2..3 + sigmoid on a finished layer-1 accumulator (f32)."""
    h1 = h1_acc_f32 + b1_ref[...].astype(jnp.float32)
    h1 = jnp.where(h1 > 0, h1, 0.2 * h1)                        # LeakyReLU(0.2)

    h2 = jnp.dot(h1.astype(w2_ref.dtype), w2_ref[...],
                 preferred_element_type=jnp.float32)
    h2 = h2 + b2_ref[...].astype(jnp.float32)
    h2 = jnp.where(h2 > 0, h2, 0.2 * h2)                        # LeakyReLU(0.2)

    # Final Linear(256, 1): N=1 would waste the MXU, so do a VPU multiply +
    # row reduction with w3 stored as a (1, 256) row.
    logits = jnp.sum(h2 * w3_ref[...].astype(jnp.float32),
                     axis=-1, keepdims=True)
    logits = logits + b3_ref[...].astype(jnp.float32)
    o_ref[...] = (pl.reciprocal(1.0 + jnp.exp(-logits), approx=False)
                  ).astype(o_ref.dtype)                          # Sigmoid


def _disc_resident_kernel(x_ref, w1_ref, b1_ref, w2_ref, b2_ref,
                          w3_ref, b3_ref, o_ref):
    # Whole flattened-image dim in one block; w1/w2 stay resident in VMEM
    # (their block index never changes -> DMA'd from HBM only once).
    h1 = jnp.dot(x_ref[...].astype(w1_ref.dtype), w1_ref[...],
                 preferred_element_type=jnp.float32)
    _epilogue(h1, b1_ref, w2_ref, b2_ref, w3_ref, b3_ref, o_ref)


def _disc_streamed_kernel(x_ref, w1_ref, b1_ref, w2_ref, b2_ref,
                          w3_ref, b3_ref, o_ref, acc_ref):
    # Fallback for very large D:
    # grid = (batch tiles ["parallel"], K tiles over D ["arbitrary"/reduction])
    k = pl.program_id(1)

    @pl.when(k == 0)
    def _():
        acc_ref[...] = jnp.zeros_like(acc_ref)

    acc_ref[...] += jnp.dot(x_ref[...].astype(w1_ref.dtype), w1_ref[...],
                            preferred_element_type=jnp.float32)

    @pl.when(k == pl.num_programs(1) - 1)
    def _():
        _epilogue(acc_ref[...], b1_ref, w2_ref, b2_ref, w3_ref, b3_ref, o_ref)


def prepare_params(params, mxu_dtype=jnp.bfloat16):
    """One-time cast of the MXU weights (w1, w2) to `mxu_dtype` (e.g. bf16).
    Biases / w3 stay f32: they are only used in the f32 epilogue."""
    w1, b1, w2, b2, w3, b3 = params
    return (w1.astype(mxu_dtype), b1, w2.astype(mxu_dtype), b2, w3, b3)


def discriminator_forward(img, params, *, block_b=256, block_k=1024,
                          force_streamed=False):
    """img: (B, C, H, W). Returns validity (B, 1) float32.

    params = (w1, b1, w2, b2, w3, b3) with w1:(D,512), w2:(512,256),
    w3:(1,256) row, b3:(1,1).  Use prepare_params() once for bf16 MXU weights;
    x is cast to w1.dtype inside the kernel.
    block_b: batch tile -- 256 fills the v6e/v7x MXU; use 128 on v5e.
    """
    w1, b1, w2, b2, w3, b3 = params
    B = img.shape[0]
    D, H1 = w1.shape                       # (in_dim, 512)
    H2 = w2.shape[1]                       # 256

    x = img.reshape(B, -1)                 # == img.view(B, -1); no copy
    assert x.shape[1] == D

    # ---- batch tiling: rows are sublanes -> multiple of 8 -------------------
    tb = min(block_b, _round_up(B, 8))
    if B >= 16 and _round_up(B, tb) // tb < 2:
        # A single batch tile would leave one v7x TensorCore idle; split in 2.
        tb = _round_up(-(-B // 2), 8)
    b_pad = _round_up(B, tb)
    if b_pad != B:
        x = jnp.pad(x, ((0, b_pad - B), (0, 0)))

    x_it = x.dtype.itemsize
    w_it = w1.dtype.itemsize
    f32 = jnp.dtype(jnp.float32).itemsize
    vmem_cap = _vmem_capacity_bytes()

    # VMEM needed with w1 fully resident (count 2 buffers per input since
    # Pallas double-buffers, even for revisited blocks).
    small_bytes = 2 * (H1 + 3 * H2 + 1) * f32 + 2 * tb * f32   # biases/w3/out
    resident_need = (2 * tb * D * x_it + 2 * D * H1 * w_it
                     + 2 * H1 * H2 * w_it + small_bytes)
    use_resident = (not force_streamed) and resident_need <= vmem_cap // 2

    headroom = 8 << 20                 # h1/h2 temporaries + compiler scratch
    num_b_tiles = b_pad // tb
    flops = 2 * b_pad * (D * H1 + H1 * H2 + H2)

    if use_resident:
        grid_spec = pltpu.PrefetchScalarGridSpec(
            num_scalar_prefetch=0,
            grid=(num_b_tiles,),
            in_specs=[
                pl.BlockSpec((tb, D), lambda i: (i, 0)),     # x   (streamed)
                pl.BlockSpec((D, H1), lambda i: (0, 0)),     # w1  (resident)
                pl.BlockSpec((1, H1), lambda i: (0, 0)),     # b1
                pl.BlockSpec((H1, H2), lambda i: (0, 0)),    # w2  (resident)
                pl.BlockSpec((1, H2), lambda i: (0, 0)),     # b2
                pl.BlockSpec((1, H2), lambda i: (0, 0)),     # w3 row
                pl.BlockSpec((1, 1), lambda i: (0, 0)),      # b3
            ],
            out_specs=pl.BlockSpec((tb, 1), lambda i: (i, 0)),
        )
        kernel = _disc_resident_kernel
        dim_sem = ("parallel",)
        need = resident_need
        w1_hbm_reads = 1
        args = (x, w1, b1, w2, b2, w3, b3)
    else:
        # Streamed-K reduction over the flattened image dim (very large D).
        tk = min(_round_up(block_k, 128), _round_up(D, 128))
        d_pad = _round_up(D, tk)
        xp = jnp.pad(x, ((0, 0), (0, d_pad - D))) if d_pad != D else x
        w1p = jnp.pad(w1, ((0, d_pad - D), (0, 0))) if d_pad != D else w1
        grid_spec = pltpu.PrefetchScalarGridSpec(
            num_scalar_prefetch=0,
            grid=(num_b_tiles, d_pad // tk),
            in_specs=[
                pl.BlockSpec((tb, tk), lambda i, k: (i, k)),   # x  (streamed)
                pl.BlockSpec((tk, H1), lambda i, k: (k, 0)),   # w1 (streamed over K)
                pl.BlockSpec((1, H1), lambda i, k: (0, 0)),    # b1
                pl.BlockSpec((H1, H2), lambda i, k: (0, 0)),   # w2 (resident)
                pl.BlockSpec((1, H2), lambda i, k: (0, 0)),    # b2
                pl.BlockSpec((1, H2), lambda i, k: (0, 0)),    # w3 row
                pl.BlockSpec((1, 1), lambda i, k: (0, 0)),     # b3
            ],
            out_specs=pl.BlockSpec((tb, 1), lambda i, k: (i, 0)),
            scratch_shapes=[pltpu.VMEM((tb, H1), jnp.float32)],
        )
        kernel = _disc_streamed_kernel
        dim_sem = ("parallel", "arbitrary")
        need = (2 * tb * tk * x_it + 2 * tk * H1 * w_it
                + 2 * H1 * H2 * w_it + tb * H1 * f32 + small_bytes)
        w1_hbm_reads = num_b_tiles       # w1 is re-streamed once per batch tile
        args = (xp, w1p, b1, w2, b2, w3, b3)

    vmem_limit = int(max(16 << 20, min(need + headroom, (vmem_cap * 9) // 10)))
    bytes_accessed = int(args[0].size * x_it
                         + args[1].size * w_it * w1_hbm_reads
                         + w2.size * w_it
                         + (b1.size + b2.size + w3.size + b3.size) * f32
                         + b_pad * f32)

    out = pl.pallas_call(
        kernel,
        out_shape=jax.ShapeDtypeStruct((b_pad, 1), jnp.float32),
        grid_spec=grid_spec,
        compiler_params=pltpu.CompilerParams(
            dimension_semantics=dim_sem,
            vmem_limit_bytes=vmem_limit,
        ),
        cost_estimate=pl.CostEstimate(flops=flops, transcendentals=b_pad,
                                      bytes_accessed=bytes_accessed),
    )(*args)

    return out[:B]


def init_params(key, in_dim):
    """PyTorch nn.Linear default init: U(-1/sqrt(fan_in), 1/sqrt(fan_in)).
    w1/w2 stored as (in_features, out_features); w3 stored as a (1, 256) row."""
    params = []
    for (fan_in, fan_out) in [(in_dim, 512), (512, 256)]:
        key, kw, kb = jax.random.split(key, 3)
        bound = 1.0 / jnp.sqrt(jnp.float32(fan_in))
        w = jax.random.uniform(kw, (fan_in, fan_out), jnp.float32, -bound, bound)
        b = jax.random.uniform(kb, (1, fan_out), jnp.float32, -bound, bound)
        params += [w, b]
    key, kw, kb = jax.random.split(key, 3)
    bound = 1.0 / jnp.sqrt(jnp.float32(256))
    w3 = jax.random.uniform(kw, (1, 256), jnp.float32, -bound, bound)
    b3 = jax.random.uniform(kb, (1, 1), jnp.float32, -bound, bound)
    params += [w3, b3]
    return tuple(params)


if __name__ == "__main__":
    # Small synthetic config: channels=1, img_size=16 -> flattened dim D = 256
    B, C, H, W = 8, 1, 16, 16
    key = jax.random.PRNGKey(0)
    k_img, k_params = jax.random.split(key)

    img = jax.random.normal(k_img, (B, C, H, W), jnp.float32)
    params = init_params(k_params, C * H * W)            # f32 weights

    # Pure-JAX reference
    x = img.reshape(B, -1)
    w1, b1, w2, b2, w3, b3 = params
    h1 = x @ w1 + b1
    h1 = jnp.where(h1 > 0, h1, 0.2 * h1)
    h2 = h1 @ w2 + b2
    h2 = jnp.where(h2 > 0, h2, 0.2 * h2)
    ref = jax.nn.sigmoid(jnp.sum(h2 * w3, axis=-1, keepdims=True) + b3)

    # 1) Fast path: w1 resident in VMEM, 1-D batch grid, f32 operands.
    out_f32 = jax.block_until_ready(discriminator_forward(img, params))
    assert out_f32.shape == (B, 1)
    assert jnp.max(jnp.abs(out_f32 - ref)) < 1e-4

    # 2) Fast path with bf16 MXU operands (weights cast once, x cast in-kernel).
    params_bf16 = prepare_params(params, jnp.bfloat16)
    out_bf16 = jax.block_until_ready(discriminator_forward(img, params_bf16))
    assert out_bf16.shape == (B, 1)
    assert jnp.max(jnp.abs(out_bf16 - ref)) < 3e-2       # bf16 operand rounding

    # 3) Streamed-K fallback path (forced with a small K block so the
    #    pl.when init/finalize reduction is exercised).
    out_str = jax.block_until_ready(
        discriminator_forward(img, params, force_streamed=True, block_k=128))
    assert out_str.shape == (B, 1)
    assert jnp.max(jnp.abs(out_str - ref)) < 1e-4

    print("KERNEL_OK")
</pallas_src>

<mosaic_0001>
module attributes {stable_mosaic.version = 11 : i64} {
  func.func @_disc_resident_kernel(%arg0: i32, %arg1: memref<8x256xf32, #tpu.memory_space<vmem>>, %arg2: memref<256x512xf32, #tpu.memory_space<vmem>>, %arg3: memref<1x512xf32, #tpu.memory_space<vmem>>, %arg4: memref<512x256xf32, #tpu.memory_space<vmem>>, %arg5: memref<1x256xf32, #tpu.memory_space<vmem>>, %arg6: memref<1x256xf32, #tpu.memory_space<vmem>>, %arg7: memref<1x1xf32, #tpu.memory_space<vmem>>, %arg8: memref<8x1xf32, #tpu.memory_space<vmem>>) attributes {dimension_semantics = [#tpu.dimension_semantics<parallel>], iteration_bounds = array<i64: 1>, scalar_prefetch = 0 : i64, scratch_operands = 0 : i64, tpu.core_type = #tpu.core_type<tc>, window_params = [{transform_indices = @transform_0, window_bounds = array<i64: 8, 256>}, {pipeline_mode = #tpu.pipeline_mode<synchronous>, transform_indices = @transform_1, window_bounds = array<i64: 256, 512>}, {pipeline_mode = #tpu.pipeline_mode<synchronous>, transform_indices = @transform_2, window_bounds = array<i64: 1, 512>}, {pipeline_mode = #tpu.pipeline_mode<synchronous>, transform_indices = @transform_3, window_bounds = array<i64: 512, 256>}, {pipeline_mode = #tpu.pipeline_mode<synchronous>, transform_indices = @transform_4, window_bounds = array<i64: 1, 256>}, {pipeline_mode = #tpu.pipeline_mode<synchronous>, transform_indices = @transform_5, window_bounds = array<i64: 1, 256>}, {pipeline_mode = #tpu.pipeline_mode<synchronous>, transform_indices = @transform_6, window_bounds = array<i64: 1, 1>}, {transform_indices = @transform_7, window_bounds = array<i64: 8, 1>}]} {
    %c0 = arith.constant 0 : index
    %c0_0 = arith.constant 0 : index
    %0 = vector.load %arg1[%c0, %c0_0] : memref<8x256xf32, #tpu.memory_space<vmem>>, vector<8x256xf32>
    %c0_1 = arith.constant 0 : index
    %c0_2 = arith.constant 0 : index
    %1 = vector.load %arg2[%c0_1, %c0_2] : memref<256x512xf32, #tpu.memory_space<vmem>>, vector<256x512xf32>
    %cst = arith.constant dense<0.000000e+00> : vector<8x512xf32>
    %2 = tpu.matmul %0, %1, %cst {dimension_numbers = #tpu.dot_dimension_numbers<[1], [0], [0], [1], [0, 0, 1, 1], [], []>} : vector<8x256xf32>, vector<256x512xf32>, vector<8x512xf32> -> vector<8x512xf32>
    %c0_3 = arith.constant 0 : index
    %c0_4 = arith.constant 0 : index
    %3 = vector.load %arg3[%c0_3, %c0_4] : memref<1x512xf32, #tpu.memory_space<vmem>>, vector<1x512xf32>
    %4 = vector.broadcast %3 : vector<1x512xf32> to vector<8x512xf32>
    %5 = arith.addf %2, %4 : vector<8x512xf32>
    %cst_5 = arith.constant 0.000000e+00 : f32
    %6 = vector.broadcast %cst_5 : f32 to vector<8x512xf32>
    %7 = arith.cmpf ogt, %5, %6 : vector<8x512xf32>
    %cst_6 = arith.constant 2.000000e-01 : f32
    %8 = vector.broadcast %cst_6 : f32 to vector<8x512xf32>
    %9 = arith.mulf %8, %5 : vector<8x512xf32>
    %10 = arith.select %7, %5, %9 : vector<8x512xi1>, vector<8x512xf32>
    %c0_7 = arith.constant 0 : index
    %c0_8 = arith.constant 0 : index
    %11 = vector.load %arg4[%c0_7, %c0_8] : memref<512x256xf32, #tpu.memory_space<vmem>>, vector<512x256xf32>
    %cst_9 = arith.constant dense<0.000000e+00> : vector<8x256xf32>
    %12 = tpu.matmul %10, %11, %cst_9 {dimension_numbers = #tpu.dot_dimension_numbers<[1], [0], [0], [1], [0, 0, 1, 1], [], []>} : vector<8x512xf32>, vector<512x256xf32>, vector<8x256xf32> -> vector<8x256xf32>
    %c0_10 = arith.constant 0 : index
    %c0_11 = arith.constant 0 : index
    %13 = vector.load %arg5[%c0_10, %c0_11] : memref<1x256xf32, #tpu.memory_space<vmem>>, vector<1x256xf32>
    %14 = vector.broadcast %13 : vector<1x256xf32> to vector<8x256xf32>
    %15 = arith.addf %12, %14 : vector<8x256xf32>
    %cst_12 = arith.constant 0.000000e+00 : f32
    %16 = vector.broadcast %cst_12 : f32 to vector<8x256xf32>
    %17 = arith.cmpf ogt, %15, %16 : vector<8x256xf32>
    %cst_13 = arith.constant 2.000000e-01 : f32
    %18 = vector.broadcast %cst_13 : f32 to vector<8x256xf32>
    %19 = arith.mulf %18, %15 : vector<8x256xf32>
    %20 = arith.select %17, %15, %19 : vector<8x256xi1>, vector<8x256xf32>
    %c0_14 = arith.constant 0 : index
    %c0_15 = arith.constant 0 : index
    %21 = vector.load %arg6[%c0_14, %c0_15] : memref<1x256xf32, #tpu.memory_space<vmem>>, vector<1x256xf32>
    %22 = vector.broadcast %21 : vector<1x256xf32> to vector<8x256xf32>
    %23 = arith.mulf %20, %22 : vector<8x256xf32>
    %cst_16 = arith.constant dense<0.000000e+00> : vector<8xf32>
    %24 = vector.multi_reduction <add>, %23, %cst_16 [1] : vector<8x256xf32> to vector<8xf32>
    %25 = vector.shape_cast %24 : vector<8xf32> to vector<8x1xf32>
    %c0_17 = arith.constant 0 : index
    %c0_18 = arith.constant 0 : index
    %26 = vector.load %arg7[%c0_17, %c0_18] : memref<1x1xf32, #tpu.memory_space<vmem>>, vector<1x1xf32>
    %27 = vector.broadcast %26 : vector<1x1xf32> to vector<8x1xf32>
    %28 = arith.addf %25, %27 : vector<8x1xf32>
    %cst_19 = arith.constant 0.000000e+00 : f32
    %29 = vector.broadcast %cst_19 : f32 to vector<8x1xf32>
    %30 = arith.subf %29, %28 : vector<8x1xf32>
    %31 = math.exp %30 : vector<8x1xf32>
    %cst_20 = arith.constant 1.000000e+00 : f32
    %32 = vector.broadcast %cst_20 : f32 to vector<8x1xf32>
    %33 = arith.addf %32, %31 : vector<8x1xf32>
    %34 = tpu.reciprocal %33 : vector<8x1xf32> -> vector<8x1xf32>
    %c0_21 = arith.constant 0 : index
    %c0_22 = arith.constant 0 : index
    %35 = vector.load %arg8[%c0_21, %c0_22] : memref<8x1xf32, #tpu.memory_space<vmem>>, vector<8x1xf32>
    tpu.vector_store %arg8[%c0_21, %c0_22], %34 {strides = array<i32>} : memref<8x1xf32, #tpu.memory_space<vmem>>, vector<8x1xf32>,
    return
  }
  func.func @transform_0(%arg0: i32) -> (i32, i32) {
    %c0_i32 = arith.constant 0 : i32
    %c0_i32_0 = arith.constant 0 : i32
    return %arg0, %c0_i32 : i32, i32
  }
  func.func @transform_1(%arg0: i32) -> (i32, i32) {
    %c0_i32 = arith.constant 0 : i32
    %c0_i32_0 = arith.constant 0 : i32
    %c0_i32_1 = arith.constant 0 : i32
    return %c0_i32, %c0_i32_0 : i32, i32
  }
  func.func @transform_2(%arg0: i32) -> (i32, i32) {
    %c0_i32 = arith.constant 0 : i32
    %c0_i32_0 = arith.constant 0 : i32
    %c0_i32_1 = arith.constant 0 : i32
    return %c0_i32, %c0_i32_0 : i32, i32
  }
  func.func @transform_3(%arg0: i32) -> (i32, i32) {
    %c0_i32 = arith.constant 0 : i32
    %c0_i32_0 = arith.constant 0 : i32
    %c0_i32_1 = arith.constant 0 : i32
    return %c0_i32, %c0_i32_0 : i32, i32
  }
  func.func @transform_4(%arg0: i32) -> (i32, i32) {
    %c0_i32 = arith.constant 0 : i32
    %c0_i32_0 = arith.constant 0 : i32
    %c0_i32_1 = arith.constant 0 : i32
    return %c0_i32, %c0_i32_0 : i32, i32
  }
  func.func @transform_5(%arg0: i32) -> (i32, i32) {
    %c0_i32 = arith.constant 0 : i32
    %c0_i32_0 = arith.constant 0 : i32
    %c0_i32_1 = arith.constant 0 : i32
    return %c0_i32, %c0_i32_0 : i32, i32
  }
  func.func @transform_6(%arg0: i32) -> (i32, i32) {
    %c0_i32 = arith.constant 0 : i32
    %c0_i32_0 = arith.constant 0 : i32
    %c0_i32_1 = arith.constant 0 : i32
    return %c0_i32, %c0_i32_0 : i32, i32
  }
  func.func @transform_7(%arg0: i32) -> (i32, i32) {
    %c0_i32 = arith.constant 0 : i32
    %c0_i32_0 = arith.constant 0 : i32
    return %arg0, %c0_i32 : i32, i32
  }
}

</mosaic_0001>

<llo_original>
// kernel: tpu_custom_call.1
$region0: #{tpu_custom_call.1}
  #allocation0 [shape = 'u32[]', space=smem, size = 0x4, offset = 0x4, fixed_abs, tag = 'smem constant byte address 0x4 - core index']
  #allocation1 [shape = 'u32[144,128]{1,0:T(1,128)}', space=vmem, size = 0x12000, scoped, tag = 'internal scratch']
  #allocation2 [shape = 'f32[1,1]{1,0:T(1,128)S(1)}', space=vmem, size = 0x200, scoped, tag = 'scoped memory for tpu_custom_call.1']
  %s0 = inlined_call_operand.hbm [shape: f32[8,256], index: 0, kind: input, shape index: {}]
  %s1 = inlined_call_operand.hbm [shape: f32[256,512], index: 1, kind: input, shape index: {}]
  %s2 = inlined_call_operand.vmem [shape: f32[1,512], index: 2, kind: input, shape index: {}]
  %s3 = inlined_call_operand.hbm [shape: f32[512,256], index: 3, kind: input, shape index: {}]
  %s4 = inlined_call_operand.vmem [shape: f32[1,256], index: 4, kind: input, shape index: {}]
  %s5 = inlined_call_operand.vmem [shape: f32[1,256], index: 5, kind: input, shape index: {}]
  %s6 = inlined_call_operand.<no memory space> [shape: f32[1,1], index: 6, kind: input, shape index: {}]
  %s7 = inlined_call_operand.vmem [shape: f32[8,1], index: 7, kind: output, shape index: {}]
  %s8 = sld [smem:[#allocation0]]
  $region50: #{tpu_custom_call.1} parent=0
    _
  %s10 = ssub.s32 1, %s8
  %s11 = scalar_select 0, %s10, %s8
  %v12 = vstv %s6
  %13 = vst [vmem:[#allocation2] sm:$0x1] %v12
  $region1: #{tpu_custom_call.1} parent=0
    #allocation3 [shape = 'u8[8192]{0}', space=vmem, size = 0x2000, scoped, tag = 'input window, operand 0, single buffered']
    #allocation4 [shape = 's32[1]{0}', space=sflag, size = 0x4, scoped, tag = 'scoped memory for tpu_custom_call.1']
    #allocation5 [shape = 'u8[524288]{0}', space=vmem, size = 0x80000, scoped, tag = 'input window, operand 1, single buffered']
    #allocation6 [shape = 's32[1]{0}', space=sflag, size = 0x4, scoped, tag = 'scoped memory for tpu_custom_call.1']
    #allocation7 [shape = 'u8[524288]{0}', space=vmem, size = 0x80000, scoped, tag = 'input window, operand 3, single buffered']
    %14 = vsyncpa [#allocation4], 0
    %15 = vsyncpa [#allocation6], 0
    // Predicated region
    $region2: #{tpu_custom_call.1} parent=1 // pred_check
      _
    $region3: #{tpu_custom_call.1} parent=1 // pred_check_branch
      %17 = sbr.rel (0) target = $region5
    $region4: #{tpu_custom_call.1} parent=1 // pred_region
      %s19 = ssub.s32 256, 256
      %20 = vsyncadd [#allocation4], %s19
      %s22 = sshll.u32 [#allocation3], 4
      %s23 = int_to_ptr.vmem [resolvable:$true] %s22
      %25 = dma.hbm_to_vmem [thread:$0]  %s0, 256, %s23, [#allocation4]
    $region5: #{tpu_custom_call.1} parent=1 // pred_fallthru
      _
    // Predicated region
    $region6: #{tpu_custom_call.1} parent=1 // pred_check
      _
    $region7: #{tpu_custom_call.1} parent=1 // pred_check_branch
      %27 = sbr.rel (0) target = $region9
    $region8: #{tpu_custom_call.1} parent=1 // pred_region
      %s29 = ssub.s32 16384, 16384
      %30 = vsyncadd [#allocation6], %s29
      %s31 = sshll.u32 [#allocation5], 4
      %s32 = int_to_ptr.vmem [resolvable:$true] %s31
      %37 = dma.hbm_to_vmem [thread:$0]  %s1, 16384, %s32, [#allocation6], 512, 512, 32
    $region9: #{tpu_custom_call.1} parent=1 // pred_fallthru
      _
    // Predicated region
    $region10: #{tpu_custom_call.1} parent=1 // pred_check
      _
    $region11: #{tpu_custom_call.1} parent=1 // pred_check_branch
      %39 = sbr.rel (0) target = $region13
    $region12: #{tpu_custom_call.1} parent=1 // pred_region
      _
    $region13: #{tpu_custom_call.1} parent=1 // pred_fallthru
      _
    // Predicated region
    $region14: #{tpu_custom_call.1} parent=1 // pred_check
      _
    $region15: #{tpu_custom_call.1} parent=1 // pred_check_branch
      %41 = sbr.rel (0) target = $region17
    $region16: #{tpu_custom_call.1} parent=1 // pred_region
      %s43 = ssub.s32 16384, 16384
      %44 = vsyncadd [#allocation6], %s43
      %s45 = sshll.u32 [#allocation7], 4
      %s46 = int_to_ptr.vmem [resolvable:$true] %s45
      %51 = dma.hbm_to_vmem [thread:$0]  %s3, 16384, %s46, [#allocation6], 256, 256, 16
    $region17: #{tpu_custom_call.1} parent=1 // pred_fallthru
      _
    // Predicated region
    $region18: #{tpu_custom_call.1} parent=1 // pred_check
      _
    $region19: #{tpu_custom_call.1} parent=1 // pred_check_branch
      %53 = sbr.rel (0) target = $region21
    $region20: #{tpu_custom_call.1} parent=1 // pred_region
      _
    $region21: #{tpu_custom_call.1} parent=1 // pred_fallthru
      _
    // Predicated region
    $region22: #{tpu_custom_call.1} parent=1 // pred_check
      _
    $region23: #{tpu_custom_call.1} parent=1 // pred_check_branch
      %55 = sbr.rel (0) target = $region25
    $region24: #{tpu_custom_call.1} parent=1 // pred_region
      _
    $region25: #{tpu_custom_call.1} parent=1 // pred_fallthru
      _
    // Predicated region
    $region26: #{tpu_custom_call.1} parent=1 // pred_check
      _
    $region27: #{tpu_custom_call.1} parent=1 // pred_check_branch
      %57 = sbr.rel (0) target = $region29
    $region28: #{tpu_custom_call.1} parent=1 // pred_region
      _
    $region29: #{tpu_custom_call.1} parent=1 // pred_fallthru
      _
    // Predicated region
    $region30: #{tpu_custom_call.1} parent=1 // pred_check
      _
    $region31: #{tpu_custom_call.1} parent=1 // pred_check_branch
      %59 = sbr.rel (0) target = $region33
    $region32: #{tpu_custom_call.1} parent=1 // pred_region
      %60 = dma.done [#allocation4], 256
    $region33: #{tpu_custom_call.1} parent=1 // pred_fallthru
      _
    // Predicated region
    $region34: #{tpu_custom_call.1} parent=1 // pred_check
      _
    $region35: #{tpu_custom_call.1} parent=1 // pred_check_branch
      %62 = sbr.rel (0) target = $region37
    $region36: #{tpu_custom_call.1} parent=1 // pred_region
      %63 = dma.done [#allocation6], 16384
    $region37: #{tpu_custom_call.1} parent=1 // pred_fallthru
      _
    // Predicated region
    $region38: #{tpu_custom_call.1} parent=1 // pred_check
      _
    $region39: #{tpu_custom_call.1} parent=1 // pred_check_branch
      %65 = sbr.rel (0) target = $region41
    $region40: #{tpu_custom_call.1} parent=1 // pred_region
      %66 = dma.done [#allocation6], 16384
    $region41: #{tpu_custom_call.1} parent=1 // pred_fallthru
      _
    %v67 = vld [vmem:[#allocation3] sm:$0xff]
    %v68 = vld [vmem:[#allocation3 + $0x8] sm:$0xff]
    %v69 = vld [vmem:[#allocation5] sm:$0xff]
    %v70 = vld [vmem:[#allocation5 + $0x8] sm:$0xff]
    %v71 = vld [vmem:[#allocation5 + $0x10] sm:$0xff]
    %v72 = vld [vmem:[#allocation5 + $0x18] sm:$0xff]
    %v73 = vld [vmem:[#allocation5 + $0x20] sm:$0xff]
    %v74 = vld [vmem:[#allocation5 + $0x28] sm:$0xff]
    %v75 = vld [vmem:[#allocation5 + $0x30] sm:$0xff]
    %v76 = vld [vmem:[#allocation5 + $0x38] sm:$0xff]
    %v77 = vld [vmem:[#allocation5 + $0x40] sm:$0xff]
    %v78 = vld [vmem:[#allocation5 + $0x48] sm:$0xff]
    %v79 = vld [vmem:[#allocation5 + $0x50] sm:$0xff]
    %v80 = vld [vmem:[#allocation5 + $0x58] sm:$0xff]
    %v81 = vld [vmem:[#allocation5 + $0x60] sm:$0xff]
    %v82 = vld [vmem:[#allocation5 + $0x68] sm:$0xff]
    %v83 = vld [vmem:[#allocation5 + $0x70] sm:$0xff]
    %v84 = vld [vmem:[#allocation5 + $0x78] sm:$0xff]
    %v85 = vld [vmem:[#allocation5 + $0x80] sm:$0xff]
    %v86 = vld [vmem:[#allocation5 + $0x88] sm:$0xff]
    %v87 = vld [vmem:[#allocation5 + $0x90] sm:$0xff]
    %v88 = vld [vmem:[#allocation5 + $0x98] sm:$0xff]
    %v89 = vld [vmem:[#allocation5 + $0xa0] sm:$0xff]
    %v90 = vld [vmem:[#allocation5 + $0xa8] sm:$0xff]
    %v91 = vld [vmem:[#allocation5 + $0xb0] sm:$0xff]
    %v92 = vld [vmem:[#allocation5 + $0xb8] sm:$0xff]
    %v93 = vld [vmem:[#allocation5 + $0xc0] sm:$0xff]
    %v94 = vld [vmem:[#allocation5 + $0xc8] sm:$0xff]
    %v95 = vld [vmem:[#allocation5 + $0xd0] sm:$0xff]
    %v96 = vld [vmem:[#allocation5 + $0xd8] sm:$0xff]
    %v97 = vld [vmem:[#allocation5 + $0xe0] sm:$0xff]
    %v98 = vld [vmem:[#allocation5 + $0xe8] sm:$0xff]
    %v99 = vld [vmem:[#allocation5 + $0xf0] sm:$0xff]
    %v100 = vld [vmem:[#allocation5 + $0xf8] sm:$0xff]
    %v101 = vld [vmem:[#allocation5 + $0x100] sm:$0xff]
    %v102 = vld [vmem:[#allocation5 + $0x108] sm:$0xff]
    %v103 = vld [vmem:[#allocation5 + $0x110] sm:$0xff]
    %v104 = vld [vmem:[#allocation5 + $0x118] sm:$0xff]
    %v105 = vld [vmem:[#allocation5 + $0x120] sm:$0xff]
    %v106 = vld [vmem:[#allocation5 + $0x128] sm:$0xff]
    %v107 = vld [vmem:[#allocation5 + $0x130] sm:$0xff]
    %v108 = vld [vmem:[#allocation5 + $0x138] sm:$0xff]
    %v109 = vld [vmem:[#allocation5 + $0x140] sm:$0xff]
    %v110 = vld [vmem:[#allocation5 + $0x148] sm:$0xff]
    %v111 = vld [vmem:[#allocation5 + $0x150] sm:$0xff]
    %v112 = vld [vmem:[#allocation5 + $0x158] sm:$0xff]
    %v113 = vld [vmem:[#allocation5 + $0x160] sm:$0xff]
    %v114 = vld [vmem:[#allocation5 + $0x168] sm:$0xff]
    %v115 = vld [vmem:[#allocation5 + $0x170] sm:$0xff]
    %v116 = vld [vmem:[#allocation5 + $0x178] sm:$0xff]
    %v117 = vld [vmem:[#allocation5 + $0x180] sm:$0xff]
    %v118 = vld [vmem:[#allocation5 + $0x188] sm:$0xff]
    %v119 = vld [vmem:[#allocation5 + $0x190] sm:$0xff]
    %v120 = vld [vmem:[#allocation5 + $0x198] sm:$0xff]
    %v121 = vld [vmem:[#allocation5 + $0x1a0] sm:$0xff]
    %v122 = vld [vmem:[#allocation5 + $0x1a8] sm:$0xff]
    %v123 = vld [vmem:[#allocation5 + $0x1b0] sm:$0xff]
    %v124 = vld [vmem:[#allocation5 + $0x1b8] sm:$0xff]
    %v125 = vld [vmem:[#allocation5 + $0x1c0] sm:$0xff]
    %v126 = vld [vmem:[#allocation5 + $0x1c8] sm:$0xff]
    %v127 = vld [vmem:[#allocation5 + $0x1d0] sm:$0xff]
    %v128 = vld [vmem:[#allocation5 + $0x1d8] sm:$0xff]
    %v129 = vld [vmem:[#allocation5 + $0x1e0] sm:$0xff]
    %v130 = vld [vmem:[#allocation5 + $0x1e8] sm:$0xff]
    %v131 = vld [vmem:[#allocation5 + $0x1f0] sm:$0xff]
    %v132 = vld [vmem:[#allocation5 + $0x1f8] sm:$0xff]
    %v133 = vld [vmem:[#allocation5 + $0x200] sm:$0xff]
    %v134 = vld [vmem:[#allocation5 + $0x208] sm:$0xff]
    %v135 = vld [vmem:[#allocation5 + $0x210] sm:$0xff]
    %v136 = vld [vmem:[#allocation5 + $0x218] sm:$0xff]
    %v137 = vld [vmem:[#allocation5 + $0x220] sm:$0xff]
    %v138 = vld [vmem:[#allocation5 + $0x228] sm:$0xff]
    %v139 = vld [vmem:[#allocation5 + $0x230] sm:$0xff]
    %v140 = vld [vmem:[#allocation5 + $0x238] sm:$0xff]
    %v141 = vld [vmem:[#allocation5 + $0x240] sm:$0xff]
    %v142 = vld [vmem:[#allocation5 + $0x248] sm:$0xff]
    %v143 = vld [vmem:[#allocation5 + $0x250] sm:$0xff]
    %v144 = vld [vmem:[#allocation5 + $0x258] sm:$0xff]
    %v145 = vld [vmem:[#allocation5 + $0x260] sm:$0xff]
    %v146 = vld [vmem:[#allocation5 + $0x268] sm:$0xff]
    %v147 = vld [vmem:[#allocation5 + $0x270] sm:$0xff]
    %v148 = vld [vmem:[#allocation5 + $0x278] sm:$0xff]
    %v149 = vld [vmem:[#allocation5 + $0x280] sm:$0xff]
    %v150 = vld [vmem:[#allocation5 + $0x288] sm:$0xff]
    %v151 = vld [vmem:[#allocation5 + $0x290] sm:$0xff]
    %v152 = vld [vmem:[#allocation5 + $0x298] sm:$0xff]
    %v153 = vld [vmem:[#allocation5 + $0x2a0] sm:$0xff]
    %v154 = vld [vmem:[#allocation5 + $0x2a8] sm:$0xff]
    %v155 = vld [vmem:[#allocation5 + $0x2b0] sm:$0xff]
    %v156 = vld [vmem:[#allocation5 + $0x2b8] sm:$0xff]
    %v157 = vld [vmem:[#allocation5 + $0x2c0] sm:$0xff]
    %v158 = vld [vmem:[#allocation5 + $0x2c8] sm:$0xff]
    %v159 = vld [vmem:[#allocation5 + $0x2d0] sm:$0xff]
    %v160 = vld [vmem:[#allocation5 + $0x2d8] sm:$0xff]
    %v161 = vld [vmem:[#allocation5 + $0x2e0] sm:$0xff]
    %v162 = vld [vmem:[#allocation5 + $0x2e8] sm:$0xff]
    %v163 = vld [vmem:[#allocation5 + $0x2f0] sm:$0xff]
    %v164 = vld [vmem:[#allocation5 + $0x2f8] sm:$0xff]
    %v165 = vld [vmem:[#allocation5 + $0x300] sm:$0xff]
    %v166 = vld [vmem:[#allocation5 + $0x308] sm:$0xff]
    %v167 = vld [vmem:[#allocation5 + $0x310] sm:$0xff]
    %v168 = vld [vmem:[#allocation5 + $0x318] sm:$0xff]
    %v169 = vld [vmem:[#allocation5 + $0x320] sm:$0xff]
    %v170 = vld [vmem:[#allocation5 + $0x328] sm:$0xff]
    %v171 = vld [vmem:[#allocation5 + $0x330] sm:$0xff]
    %v172 = vld [vmem:[#allocation5 + $0x338] sm:$0xff]
    %v173 = vld [vmem:[#allocation5 + $0x340] sm:$0xff]
    %v174 = vld [vmem:[#allocation5 + $0x348] sm:$0xff]
    %v175 = vld [vmem:[#allocation5 + $0x350] sm:$0xff]
    %v176 = vld [vmem:[#allocation5 + $0x358] sm:$0xff]
    %v177 = vld [vmem:[#allocation5 + $0x360] sm:$0xff]
    %v178 = vld [vmem:[#allocation5 + $0x368] sm:$0xff]
    %v179 = vld [vmem:[#allocation5 + $0x370] sm:$0xff]
    %v180 = vld [vmem:[#allocation5 + $0x378] sm:$0xff]
    %v181 = vld [vmem:[#allocation5 + $0x380] sm:$0xff]
    %v182 = vld [vmem:[#allocation5 + $0x388] sm:$0xff]
    %v183 = vld [vmem:[#allocation5 + $0x390] sm:$0xff]
    %v184 = vld [vmem:[#allocation5 + $0x398] sm:$0xff]
    %v185 = vld [vmem:[#allocation5 + $0x3a0] sm:$0xff]
    %v186 = vld [vmem:[#allocation5 + $0x3a8] sm:$0xff]
    %v187 = vld [vmem:[#allocation5 + $0x3b0] sm:$0xff]
    %v188 = vld [vmem:[#allocation5 + $0x3b8] sm:$0xff]
    %v189 = vld [vmem:[#allocation5 + $0x3c0] sm:$0xff]
    %v190 = vld [vmem:[#allocation5 + $0x3c8] sm:$0xff]
    %v191 = vld [vmem:[#allocation5 + $0x3d0] sm:$0xff]
    %v192 = vld [vmem:[#allocation5 + $0x3d8] sm:$0xff]
    %v193 = vld [vmem:[#allocation5 + $0x3e0] sm:$0xff]
    %v194 = vld [vmem:[#allocation5 + $0x3e8] sm:$0xff]
    %v195 = vld [vmem:[#allocation5 + $0x3f0] sm:$0xff]
    %v196 = vld [vmem:[#allocation5 + $0x3f8] sm:$0xff]
    %v197 = vld [vmem:[%s2] sm:$0xf]
    %v199 = vlaneseq
    %v200 = vshrl.u32 %v199, 7
    %v201 = vsub.s32 0, %v200
    %v202 = vrot.slane %v197, %v201
    %v203 = vlaneseq
    %v204 = vshrl.u32 %v203, 7
    %v205 = vsub.s32 1, %v204
    %v206 = vrot.slane %v197, %v205
    %v207 = vlaneseq
    %v208 = vshrl.u32 %v207, 7
    %v209 = vsub.s32 2, %v208
    %v210 = vrot.slane %v197, %v209
    %v211 = vlaneseq
    %v212 = vshrl.u32 %v211, 7
    %v213 = vsub.s32 3, %v212
    %v214 = vrot.slane %v197, %v213
    %219 = vmatprep.subr.mxu0 %v70
    %220 = vmatpush1.msra.mxu0 %v69
    %221 = vmatprep.subr.mxu0 %v74
    %222 = vmatpush1.msra.mxu0 %v73
    %223 = vmatprep.subr.mxu0 %v78
    %224 = vmatpush1.msra.mxu0 %v77
    %225 = vmatprep.subr.mxu0 %v82
    %226 = vmatpush1.msra.mxu0 %v81
    %227 = vmatprep.subr.mxu0 %v86
    %228 = vmatpush1.msra.mxu0 %v85
    %229 = vmatprep.subr.mxu0 %v90
    %230 = vmatpush1.msra.mxu0 %v89
    %231 = vmatprep.subr.mxu0 %v94
    %232 = vmatpush1.msra.mxu0 %v93
    %233 = vmatprep.subr.mxu0 %v98
    %234 = vmatpush1.msra.mxu0 %v97
    %235 = vmatprep.subr.mxu0 %v102
    %236 = vmatpush1.msra.mxu0 %v101
    %237 = vmatprep.subr.mxu0 %v106
    %238 = vmatpush1.msra.mxu0 %v105
    %239 = vmatprep.subr.mxu0 %v110
    %240 = vmatpush1.msra.mxu0 %v109
    %241 = vmatprep.subr.mxu0 %v114
    %242 = vmatpush1.msra.mxu0 %v113
    %243 = vmatprep.subr.mxu0 %v118
    %244 = vmatpush1.msra.mxu0 %v117
    %245 = vmatprep.subr.mxu0 %v122
    %246 = vmatpush1.msra.mxu0 %v121
    %247 = vmatprep.subr.mxu0 %v126
    %248 = vmatpush1.msra.mxu0 %v125
    %249 = vmatprep.subr.mxu0 %v130
    %250 = vmatpush1.msra.mxu0 %v129
    %251 = vmatprep.subr.mxu0 %v134
    %252 = vmatpush1.msra.mxu0 %v133
    %253 = vmatprep.subr.mxu0 %v138
    %254 = vmatpush1.msra.mxu0 %v137
    %255 = vmatprep.subr.mxu0 %v142
    %256 = vmatpush1.msra.mxu0 %v141
    %257 = vmatprep.subr.mxu0 %v146
    %258 = vmatpush1.msra.mxu0 %v145
    %259 = vmatprep.subr.mxu0 %v150
    %260 = vmatpush1.msra.mxu0 %v149
    %261 = vmatprep.subr.mxu0 %v154
    %262 = vmatpush1.msra.mxu0 %v153
    %263 = vmatprep.subr.mxu0 %v158
    %264 = vmatpush1.msra.mxu0 %v157
    %265 = vmatprep.subr.mxu0 %v162
    %266 = vmatpush1.msra.mxu0 %v161
    %267 = vmatprep.subr.mxu0 %v166
    %268 = vmatpush1.msra.mxu0 %v165
    %269 = vmatprep.subr.mxu0 %v170
    %270 = vmatpush1.msra.mxu0 %v169
    %271 = vmatprep.subr.mxu0 %v174
    %272 = vmatpush1.msra.mxu0 %v173
    %273 = vmatprep.subr.mxu0 %v178
    %274 = vmatpush1.msra.mxu0 %v177
    %275 = vmatprep.subr.mxu0 %v182
    %276 = vmatpush1.msra.mxu0 %v181
    %277 = vmatprep.subr.mxu0 %v186
    %278 = vmatpush1.msra.mxu0 %v185
    %279 = vmatprep.subr.mxu0 %v190
    %280 = vmatpush1.msra.mxu0 %v189
    %281 = vmatprep.subr.mxu0 %v194
    %282 = vmatpush1.msra.mxu0 %v193
    %283 = vmatprep.mubr.f32.mxu0 %v68
    %284 = vmatmul.mubr.f32.gmra.mrb[0].mxu0 %v67
    %v285 = vpop.f32.mrb[0].mxu0
    %v286 = vadd.f32 %v202, %v285
    %v287 = vpop.f32.mrb[0].mxu0
    %v288 = vadd.f32 %v206, %v287
    %289 = vdwg.mxu0
    %290 = vmatprep.subr.mxu0 %v72
    %291 = vmatpush1.msra.mxu0 %v71
    %292 = vmatprep.subr.mxu0 %v76
    %293 = vmatpush1.msra.mxu0 %v75
    %294 = vmatprep.subr.mxu0 %v80
    %295 = vmatpush1.msra.mxu0 %v79
    %296 = vmatprep.subr.mxu0 %v84
    %297 = vmatpush1.msra.mxu0 %v83
    %298 = vmatprep.subr.mxu0 %v88
    %299 = vmatpush1.msra.mxu0 %v87
    %300 = vmatprep.subr.mxu0 %v92
    %301 = vmatpush1.msra.mxu0 %v91
    %302 = vmatprep.subr.mxu0 %v96
    %303 = vmatpush1.msra.mxu0 %v95
    %304 = vmatprep.subr.mxu0 %v100
    %305 = vmatpush1.msra.mxu0 %v99
    %306 = vmatprep.subr.mxu0 %v104
    %307 = vmatpush1.msra.mxu0 %v103
    %308 = vmatprep.subr.mxu0 %v108
    %309 = vmatpush1.msra.mxu0 %v107
    %310 = vmatprep.subr.mxu0 %v112
    %311 = vmatpush1.msra.mxu0 %v111
    %312 = vmatprep.subr.mxu0 %v116
    %313 = vmatpush1.msra.mxu0 %v115
    %314 = vmatprep.subr.mxu0 %v120
    %315 = vmatpush1.msra.mxu0 %v119
    %316 = vmatprep.subr.mxu0 %v124
    %317 = vmatpush1.msra.mxu0 %v123
    %318 = vmatprep.subr.mxu0 %v128
    %319 = vmatpush1.msra.mxu0 %v127
    %320 = vmatprep.subr.mxu0 %v132
    %321 = vmatpush1.msra.mxu0 %v131
    %322 = vmatprep.subr.mxu0 %v136
    %323 = vmatpush1.msra.mxu0 %v135
    %324 = vmatprep.subr.mxu0 %v140
    %325 = vmatpush1.msra.mxu0 %v139
    %326 = vmatprep.subr.mxu0 %v144
    %327 = vmatpush1.msra.mxu0 %v143
    %328 = vmatprep.subr.mxu0 %v148
    %329 = vmatpush1.msra.mxu0 %v147
    %330 = vmatprep.subr.mxu0 %v152
    %331 = vmatpush1.msra.mxu0 %v151
    %332 = vmatprep.subr.mxu0 %v156
    %333 = vmatpush1.msra.mxu0 %v155
    %334 = vmatprep.subr.mxu0 %v160
    %335 = vmatpush1.msra.mxu0 %v159
    %336 = vmatprep.subr.mxu0 %v164
    %337 = vmatpush1.msra.mxu0 %v163
    %338 = vmatprep.subr.mxu0 %v168
    %339 = vmatpush1.msra.mxu0 %v167
    %340 = vmatprep.subr.mxu0 %v172
    %341 = vmatpush1.msra.mxu0 %v171
    %342 = vmatprep.subr.mxu0 %v176
    %343 = vmatpush1.msra.mxu0 %v175
    %344 = vmatprep.subr.mxu0 %v180
    %345 = vmatpush1.msra.mxu0 %v179
    %346 = vmatprep.subr.mxu0 %v184
    %347 = vmatpush1.msra.mxu0 %v183
    %348 = vmatprep.subr.mxu0 %v188
    %349 = vmatpush1.msra.mxu0 %v187
    %350 = vmatprep.subr.mxu0 %v192
    %351 = vmatpush1.msra.mxu0 %v191
    %352 = vmatprep.subr.mxu0 %v196
    %353 = vmatpush1.msra.mxu0 %v195
    %354 = vmatprep.mubr.f32.mxu0 %v68
    %355 = vmatmul.mubr.f32.gmra.mrb[0].mxu0 %v67
    %v356 = vpop.f32.mrb[0].mxu0
    %v357 = vadd.f32 %v210, %v356
    %v358 = vpop.f32.mrb[0].mxu0
    %v359 = vadd.f32 %v214, %v358
    %360 = vdwg.mxu0
    %vm361 = vcmp.gt.f32.partialorder %v286, 0.0
    %vm362 = vcmp.gt.f32.partialorder %v288, 0.0
    %vm363 = vcmp.gt.f32.partialorder %v357, 0.0
    %vm364 = vcmp.gt.f32.partialorder %v359, 0.0
    %v365 = vmul.f32 %v286, 0.2
    %v366 = vmul.f32 %v288, 0.2
    %v367 = vmul.f32 %v357, 0.2
    %v368 = vmul.f32 %v359, 0.2
    %v369 = vsel %vm361, %v286, %v365
    %v370 = vsel %vm362, %v288, %v366
    %v371 = vsel %vm363, %v357, %v367
    %v372 = vsel %vm364, %v359, %v368
    %v373 = vld [vmem:[#allocation7] sm:$0xff]
    %v374 = vld [vmem:[#allocation7 + $0x8] sm:$0xff]
    %v375 = vld [vmem:[#allocation7 + $0x10] sm:$0xff]
    %v376 = vld [vmem:[#allocation7 + $0x18] sm:$0xff]
    %v377 = vld [vmem:[#allocation7 + $0x20] sm:$0xff]
    %v378 = vld [vmem:[#allocation7 + $0x28] sm:$0xff]
    %v379 = vld [vmem:[#allocation7 + $0x30] sm:$0xff]
    %v380 = vld [vmem:[#allocation7 + $0x38] sm:$0xff]
    %v381 = vld [vmem:[#allocation7 + $0x40] sm:$0xff]
    %v382 = vld [vmem:[#allocation7 + $0x48] sm:$0xff]
    %v383 = vld [vmem:[#allocation7 + $0x50] sm:$0xff]
    %v384 = vld [vmem:[#allocation7 + $0x58] sm:$0xff]
    %v385 = vld [vmem:[#allocation7 + $0x60] sm:$0xff]
    %v386 = vld [vmem:[#allocation7 + $0x68] sm:$0xff]
    %v387 = vld [vmem:[#allocation7 + $0x70] sm:$0xff]
    %v388 = vld [vmem:[#allocation7 + $0x78] sm:$0xff]
    %v389 = vld [vmem:[#allocation7 + $0x80] sm:$0xff]
    %v390 = vld [vmem:[#allocation7 + $0x88] sm:$0xff]
    %v391 = vld [vmem:[#allocation7 + $0x90] sm:$0xff]
    %v392 = vld [vmem:[#allocation7 + $0x98] sm:$0xff]
    %v393 = vld [vmem:[#allocation7 + $0xa0] sm:$0xff]
    %v394 = vld [vmem:[#allocation7 + $0xa8] sm:$0xff]
    %v395 = vld [vmem:[#allocation7 + $0xb0] sm:$0xff]
    %v396 = vld [vmem:[#allocation7 + $0xb8] sm:$0xff]
    %v397 = vld [vmem:[#allocation7 + $0xc0] sm:$0xff]
    %v398 = vld [vmem:[#allocation7 + $0xc8] sm:$0xff]
    %v399 = vld [vmem:[#allocation7 + $0xd0] sm:$0xff]
    %v400 = vld [vmem:[#allocation7 + $0xd8] sm:$0xff]
    %v401 = vld [vmem:[#allocation7 + $0xe0] sm:$0xff]
    %v402 = vld [vmem:[#allocation7 + $0xe8] sm:$0xff]
    %v403 = vld [vmem:[#allocation7 + $0xf0] sm:$0xff]
    %v404 = vld [vmem:[#allocation7 + $0xf8] sm:$0xff]
    %v405 = vld [vmem:[#allocation7 + $0x100] sm:$0xff]
    %v406 = vld [vmem:[#allocation7 + $0x108] sm:$0xff]
    %v407 = vld [vmem:[#allocation7 + $0x110] sm:$0xff]
    %v408 = vld [vmem:[#allocation7 + $0x118] sm:$0xff]
    %v409 = vld [vmem:[#allocation7 + $0x120] sm:$0xff]
    %v410 = vld [vmem:[#allocation7 + $0x128] sm:$0xff]
    %v411 = vld [vmem:[#allocation7 + $0x130] sm:$0xff]
    %v412 = vld [vmem:[#allocation7 + $0x138] sm:$0xff]
    %v413 = vld [vmem:[#allocation7 + $0x140] sm:$0xff]
    %v414 = vld [vmem:[#allocation7 + $0x148] sm:$0xff]
    %v415 = vld [vmem:[#allocation7 + $0x150] sm:$0xff]
    %v416 = vld [vmem:[#allocation7 + $0x158] sm:$0xff]
    %v417 = vld [vmem:[#allocation7 + $0x160] sm:$0xff]
    %v418 = vld [vmem:[#allocation7 + $0x168] sm:$0xff]
    %v419 = vld [vmem:[#allocation7 + $0x170] sm:$0xff]
    %v420 = vld [vmem:[#allocation7 + $0x178] sm:$0xff]
    %v421 = vld [vmem:[#allocation7 + $0x180] sm:$0xff]
    %v422 = vld [vmem:[#allocation7 + $0x188] sm:$0xff]
    %v423 = vld [vmem:[#allocation7 + $0x190] sm:$0xff]
    %v424 = vld [vmem:[#allocation7 + $0x198] sm:$0xff]
    %v425 = vld [vmem:[#allocation7 + $0x1a0] sm:$0xff]
    %v426 = vld [vmem:[#allocation7 + $0x1a8] sm:$0xff]
    %v427 = vld [vmem:[#allocation7 + $0x1b0] sm:$0xff]
    %v428 = vld [vmem:[#allocation7 + $0x1b8] sm:$0xff]
    %v429 = vld [vmem:[#allocation7 + $0x1c0] sm:$0xff]
    %v430 = vld [vmem:[#allocation7 + $0x1c8] sm:$0xff]
    %v431 = vld [vmem:[#allocation7 + $0x1d0] sm:$0xff]
    %v432 = vld [vmem:[#allocation7 + $0x1d8] sm:$0xff]
    %v433 = vld [vmem:[#allocation7 + $0x1e0] sm:$0xff]
    %v434 = vld [vmem:[#allocation7 + $0x1e8] sm:$0xff]
    %v435 = vld [vmem:[#allocation7 + $0x1f0] sm:$0xff]
    %v436 = vld [vmem:[#allocation7 + $0x1f8] sm:$0xff]
    %v437 = vld [vmem:[#allocation7 + $0x200] sm:$0xff]
    %v438 = vld [vmem:[#allocation7 + $0x208] sm:$0xff]
    %v439 = vld [vmem:[#allocation7 + $0x210] sm:$0xff]
    %v440 = vld [vmem:[#allocation7 + $0x218] sm:$0xff]
    %v441 = vld [vmem:[#allocation7 + $0x220] sm:$0xff]
    %v442 = vld [vmem:[#allocation7 + $0x228] sm:$0xff]
    %v443 = vld [vmem:[#allocation7 + $0x230] sm:$0xff]
    %v444 = vld [vmem:[#allocation7 + $0x238] sm:$0xff]
    %v445 = vld [vmem:[#allocation7 + $0x240] sm:$0xff]
    %v446 = vld [vmem:[#allocation7 + $0x248] sm:$0xff]
    %v447 = vld [vmem:[#allocation7 + $0x250] sm:$0xff]
    %v448 = vld [vmem:[#allocation7 + $0x258] sm:$0xff]
    %v449 = vld [vmem:[#allocation7 + $0x260] sm:$0xff]
    %v450 = vld [vmem:[#allocation7 + $0x268] sm:$0xff]
    %v451 = vld [vmem:[#allocation7 + $0x270] sm:$0xff]
    %v452 = vld [vmem:[#allocation7 + $0x278] sm:$0xff]
    %v453 = vld [vmem:[#allocation7 + $0x280] sm:$0xff]
    %v454 = vld [vmem:[#allocation7 + $0x288] sm:$0xff]
    %v455 = vld [vmem:[#allocation7 + $0x290] sm:$0xff]
    %v456 = vld [vmem:[#allocation7 + $0x298] sm:$0xff]
    %v457 = vld [vmem:[#allocation7 + $0x2a0] sm:$0xff]
    %v458 = vld [vmem:[#allocation7 + $0x2a8] sm:$0xff]
    %v459 = vld [vmem:[#allocation7 + $0x2b0] sm:$0xff]
    %v460 = vld [vmem:[#allocation7 + $0x2b8] sm:$0xff]
    %v461 = vld [vmem:[#allocation7 + $0x2c0] sm:$0xff]
    %v462 = vld [vmem:[#allocation7 + $0x2c8] sm:$0xff]
    %v463 = vld [vmem:[#allocation7 + $0x2d0] sm:$0xff]
    %v464 = vld [vmem:[#allocation7 + $0x2d8] sm:$0xff]
    %v465 = vld [vmem:[#allocation7 + $0x2e0] sm:$0xff]
    %v466 = vld [vmem:[#allocation7 + $0x2e8] sm:$0xff]
    %v467 = vld [vmem:[#allocation7 + $0x2f0] sm:$0xff]
    %v468 = vld [vmem:[#allocation7 + $0x2f8] sm:$0xff]
    %v469 = vld [vmem:[#allocation7 + $0x300] sm:$0xff]
    %v470 = vld [vmem:[#allocation7 + $0x308] sm:$0xff]
    %v471 = vld [vmem:[#allocation7 + $0x310] sm:$0xff]
    %v472 = vld [vmem:[#allocation7 + $0x318] sm:$0xff]
    %v473 = vld [vmem:[#allocation7 + $0x320] sm:$0xff]
    %v474 = vld [vmem:[#allocation7 + $0x328] sm:$0xff]
    %v475 = vld [vmem:[#allocation7 + $0x330] sm:$0xff]
    %v476 = vld [vmem:[#allocation7 + $0x338] sm:$0xff]
    %v477 = vld [vmem:[#allocation7 + $0x340] sm:$0xff]
    %v478 = vld [vmem:[#allocation7 + $0x348] sm:$0xff]
    %v479 = vld [vmem:[#allocation7 + $0x350] sm:$0xff]
    %v480 = vld [vmem:[#allocation7 + $0x358] sm:$0xff]
    %v481 = vld [vmem:[#allocation7 + $0x360] sm:$0xff]
    %v482 = vld [vmem:[#allocation7 + $0x368] sm:$0xff]
    %v483 = vld [vmem:[#allocation7 + $0x370] sm:$0xff]
    %v484 = vld [vmem:[#allocation7 + $0x378] sm:$0xff]
    %v485 = vld [vmem:[#allocation7 + $0x380] sm:$0xff]
    %v486 = vld [vmem:[#allocation7 + $0x388] sm:$0xff]
    %v487 = vld [vmem:[#allocation7 + $0x390] sm:$0xff]
    %v488 = vld [vmem:[#allocation7 + $0x398] sm:$0xff]
    %v489 = vld [vmem:[#allocation7 + $0x3a0] sm:$0xff]
    %v490 = vld [vmem:[#allocation7 + $0x3a8] sm:$0xff]
    %v491 = vld [vmem:[#allocation7 + $0x3b0] sm:$0xff]
    %v492 = vld [vmem:[#allocation7 + $0x3b8] sm:$0xff]
    %v493 = vld [vmem:[#allocation7 + $0x3c0] sm:$0xff]
    %v494 = vld [vmem:[#allocation7 + $0x3c8] sm:$0xff]
    %v495 = vld [vmem:[#allocation7 + $0x3d0] sm:$0xff]
    %v496 = vld [vmem:[#allocation7 + $0x3d8] sm:$0xff]
    %v497 = vld [vmem:[#allocation7 + $0x3e0] sm:$0xff]
    %v498 = vld [vmem:[#allocation7 + $0x3e8] sm:$0xff]
    %v499 = vld [vmem:[#allocation7 + $0x3f0] sm:$0xff]
    %v500 = vld [vmem:[#allocation7 + $0x3f8] sm:$0xff]
    %v501 = vld [vmem:[%s4] sm:$0x3]
    %v503 = vlaneseq
    %v504 = vshrl.u32 %v503, 7
    %v505 = vsub.s32 0, %v504
    %v506 = vrot.slane %v501, %v505
    %v507 = vlaneseq
    %v508 = vshrl.u32 %v507, 7
    %v509 = vsub.s32 1, %v508
    %v510 = vrot.slane %v501, %v509
    %513 = vmatprep.subr.mxu0 %v374
    %514 = vmatpush1.msra.mxu0 %v373
    %515 = vmatprep.subr.mxu0 %v376
    %516 = vmatpush1.msra.mxu0 %v375
    %517 = vmatprep.subr.mxu0 %v378
    %518 = vmatpush1.msra.mxu0 %v377
    %519 = vmatprep.subr.mxu0 %v380
    %520 = vmatpush1.msra.mxu0 %v379
    %521 = vmatprep.subr.mxu0 %v382
    %522 = vmatpush1.msra.mxu0 %v381
    %523 = vmatprep.subr.mxu0 %v384
    %524 = vmatpush1.msra.mxu0 %v383
    %525 = vmatprep.subr.mxu0 %v386
    %526 = vmatpush1.msra.mxu0 %v385
    %527 = vmatprep.subr.mxu0 %v388
    %528 = vmatpush1.msra.mxu0 %v387
    %529 = vmatprep.subr.mxu0 %v390
    %530 = vmatpush1.msra.mxu0 %v389
    %531 = vmatprep.subr.mxu0 %v392
    %532 = vmatpush1.msra.mxu0 %v391
    %533 = vmatprep.subr.mxu0 %v394
    %534 = vmatpush1.msra.mxu0 %v393
    %535 = vmatprep.subr.mxu0 %v396
    %536 = vmatpush1.msra.mxu0 %v395
    %537 = vmatprep.subr.mxu0 %v398
    %538 = vmatpush1.msra.mxu0 %v397
    %539 = vmatprep.subr.mxu0 %v400
    %540 = vmatpush1.msra.mxu0 %v399
    %541 = vmatprep.subr.mxu0 %v402
    %542 = vmatpush1.msra.mxu0 %v401
    %543 = vmatprep.subr.mxu0 %v404
    %544 = vmatpush1.msra.mxu0 %v403
    %545 = vmatprep.subr.mxu0 %v406
    %546 = vmatpush1.msra.mxu0 %v405
    %547 = vmatprep.subr.mxu0 %v408
    %548 = vmatpush1.msra.mxu0 %v407
    %549 = vmatprep.subr.mxu0 %v410
    %550 = vmatpush1.msra.mxu0 %v409
    %551 = vmatprep.subr.mxu0 %v412
    %552 = vmatpush1.msra.mxu0 %v411
    %553 = vmatprep.subr.mxu0 %v414
    %554 = vmatpush1.msra.mxu0 %v413
    %555 = vmatprep.subr.mxu0 %v416
    %556 = vmatpush1.msra.mxu0 %v415
    %557 = vmatprep.subr.mxu0 %v418
    %558 = vmatpush1.msra.mxu0 %v417
    %559 = vmatprep.subr.mxu0 %v420
    %560 = vmatpush1.msra.mxu0 %v419
    %561 = vmatprep.subr.mxu0 %v422
    %562 = vmatpush1.msra.mxu0 %v421
    %563 = vmatprep.subr.mxu0 %v424
    %564 = vmatpush1.msra.mxu0 %v423
    %565 = vmatprep.subr.mxu0 %v426
    %566 = vmatpush1.msra.mxu0 %v425
    %567 = vmatprep.subr.mxu0 %v428
    %568 = vmatpush1.msra.mxu0 %v427
    %569 = vmatprep.subr.mxu0 %v430
    %570 = vmatpush1.msra.mxu0 %v429
    %571 = vmatprep.subr.mxu0 %v432
    %572 = vmatpush1.msra.mxu0 %v431
    %573 = vmatprep.subr.mxu0 %v434
    %574 = vmatpush1.msra.mxu0 %v433
    %575 = vmatprep.subr.mxu0 %v436
    %576 = vmatpush1.msra.mxu0 %v435
    %577 = vmatprep.mubr.f32.mxu0 %v370
    %578 = vmatmul.mubr.f32.gmra.mrb[0].mxu0 %v369
    %v579 = vpop.f32.mrb[0].mxu0
    %v580 = vadd.f32 %v506, %v579
    %v581 = vpop.f32.mrb[0].mxu0
    %v582 = vadd.f32 %v510, %v581
    %583 = vdwg.mxu0
    %584 = vmatprep.subr.mxu0 %v438
    %585 = vmatpush1.msra.mxu0 %v437
    %586 = vmatprep.subr.mxu0 %v440
    %587 = vmatpush1.msra.mxu0 %v439
    %588 = vmatprep.subr.mxu0 %v442
    %589 = vmatpush1.msra.mxu0 %v441
    %590 = vmatprep.subr.mxu0 %v444
    %591 = vmatpush1.msra.mxu0 %v443
    %592 = vmatprep.subr.mxu0 %v446
    %593 = vmatpush1.msra.mxu0 %v445
    %594 = vmatprep.subr.mxu0 %v448
    %595 = vmatpush1.msra.mxu0 %v447
    %596 = vmatprep.subr.mxu0 %v450
    %597 = vmatpush1.msra.mxu0 %v449
    %598 = vmatprep.subr.mxu0 %v452
    %599 = vmatpush1.msra.mxu0 %v451
    %600 = vmatprep.subr.mxu0 %v454
    %601 = vmatpush1.msra.mxu0 %v453
    %602 = vmatprep.subr.mxu0 %v456
    %603 = vmatpush1.msra.mxu0 %v455
    %604 = vmatprep.subr.mxu0 %v458
    %605 = vmatpush1.msra.mxu0 %v457
    %606 = vmatprep.subr.mxu0 %v460
    %607 = vmatpush1.msra.mxu0 %v459
    %608 = vmatprep.subr.mxu0 %v462
    %609 = vmatpush1.msra.mxu0 %v461
    %610 = vmatprep.subr.mxu0 %v464
    %611 = vmatpush1.msra.mxu0 %v463
    %612 = vmatprep.subr.mxu0 %v466
    %613 = vmatpush1.msra.mxu0 %v465
    %614 = vmatprep.subr.mxu0 %v468
    %615 = vmatpush1.msra.mxu0 %v467
    %616 = vmatprep.subr.mxu0 %v470
    %617 = vmatpush1.msra.mxu0 %v469
    %618 = vmatprep.subr.mxu0 %v472
    %619 = vmatpush1.msra.mxu0 %v471
    %620 = vmatprep.subr.mxu0 %v474
    %621 = vmatpush1.msra.mxu0 %v473
    %622 = vmatprep.subr.mxu0 %v476
    %623 = vmatpush1.msra.mxu0 %v475
    %624 = vmatprep.subr.mxu0 %v478
    %625 = vmatpush1.msra.mxu0 %v477
    %626 = vmatprep.subr.mxu0 %v480
    %627 = vmatpush1.msra.mxu0 %v479
    %628 = vmatprep.subr.mxu0 %v482
    %629 = vmatpush1.msra.mxu0 %v481
    %630 = vmatprep.subr.mxu0 %v484
    %631 = vmatpush1.msra.mxu0 %v483
    %632 = vmatprep.subr.mxu0 %v486
    %633 = vmatpush1.msra.mxu0 %v485
    %634 = vmatprep.subr.mxu0 %v488
    %635 = vmatpush1.msra.mxu0 %v487
    %636 = vmatprep.subr.mxu0 %v490
    %637 = vmatpush1.msra.mxu0 %v489
    %638 = vmatprep.subr.mxu0 %v492
    %639 = vmatpush1.msra.mxu0 %v491
    %640 = vmatprep.subr.mxu0 %v494
    %641 = vmatpush1.msra.mxu0 %v493
    %642 = vmatprep.subr.mxu0 %v496
    %643 = vmatpush1.msra.mxu0 %v495
    %644 = vmatprep.subr.mxu0 %v498
    %645 = vmatpush1.msra.mxu0 %v497
    %646 = vmatprep.subr.mxu0 %v500
    %647 = vmatpush1.msra.mxu0 %v499
    %648 = vmatprep.mubr.f32.mxu0 %v372
    %649 = vmatmul.mubr.f32.gmra.mrb[0].mxu0 %v371
    %v650 = vpop.f32.mrb[0].mxu0
    %v651 = vadd.f32 %v580, %v650
    %v652 = vpop.f32.mrb[0].mxu0
    %v653 = vadd.f32 %v582, %v652
    %654 = vdwg.mxu0
    %vm655 = vcmp.gt.f32.partialorder %v651, 0.0
    %vm656 = vcmp.gt.f32.partialorder %v653, 0.0
    %v657 = vmul.f32 %v651, 0.2
    %v658 = vmul.f32 %v653, 0.2
    %v659 = vsel %vm655, %v651, %v657
    %v660 = vsel %vm656, %v653, %v658
    %v661 = vld [vmem:[%s5] sm:$0x3]
    %v663 = vlaneseq
    %v664 = vshrl.u32 %v663, 7
    %v665 = vsub.s32 0, %v664
    %v666 = vrot.slane %v661, %v665
    %v667 = vlaneseq
    %v668 = vshrl.u32 %v667, 7
    %v669 = vsub.s32 1, %v668
    %v670 = vrot.slane %v661, %v669
    %v673 = vmul.f32 %v659, %v666
    %v674 = vmul.f32 %v660, %v670
    %v675 = vadd.f32 %v673, %v674
    %676 = vadd.xlane.f32.xlu0 %v675
    %v677 = vpop.xlane.xlu0 %676
    %v678 = vld [vmem:[#allocation2] sm:$0x1]
    %v680 = vlaneseq
    %v681 = vshrl.u32 %v680, 7
    %v682 = vsub.s32 0, %v681
    %v683 = vrot.slane %v678, %v682
    %v685 = vadd.f32 %v677, %v683
    %v686 = vsub.f32 0.0, %v685
    %v687 = vmul.f32 %v686, 1.442695
    %v688 = vpow.pop %v687
    %v689 = vadd.f32 %v688, 1.0
    %v690 = vrcp.pop %v689
    %vm691 = vcmask 7168
    %692 = vst.msk [vmem:[%s7] sm:$0xff] %vm691, %v690
    // Predicated region
    $region42: #{tpu_custom_call.1} parent=1 // pred_check
      _
    $region43: #{tpu_custom_call.1} parent=1 // pred_check_branch
      %694 = sbr.rel (0) target = $region45
    $region44: #{tpu_custom_call.1} parent=1 // pred_region
      _
    $region45: #{tpu_custom_call.1} parent=1 // pred_fallthru
      _
    // Predicated region
    $region46: #{tpu_custom_call.1} parent=1 // pred_check
      _
    $region47: #{tpu_custom_call.1} parent=1 // pred_check_branch
      %696 = sbr.rel (0) target = $region49
    $region48: #{tpu_custom_call.1} parent=1 // pred_region
      _
    $region49: #{tpu_custom_call.1} parent=1 // pred_fallthru
      _
    %697 = vsyncpa [#allocation4], 1
    %698 = vsyncpa [#allocation6], 1

</llo_original>
